<compile_context>
chip_gen: v6e
topology: v6e:2x2x1
jax: 0.10.0
libtpu: 0.0.40
codegen_flags: <defaults>
</compile_context>

<pallas_src>
import jax
import jax.numpy as jnp
from jax.experimental import pallas as pl
from jax.experimental.pallas import tpu as pltpu


def _fused_cat_tanh_sum_kernel(x_ref, wl_ref, wr_ref, out_ref):
    """sum(tanh(concat([x, x], -1) * w)) without materializing the concat.

    x_ref:  (Rx, CD) f32 VMEM  (Rx == R, or Rx == 1 -> broadcast over w rows)
    wl_ref: (R,  CD) f32 VMEM  (w[:, :CD], split in the wrapper -> lane-0 aligned)
    wr_ref: (R,  CD) f32 VMEM  (w[:, CD:], split in the wrapper -> lane-0 aligned)
    out_ref: (1, 1)  f32 SMEM  scalar result
    """
    x = x_ref[...]
    t = jnp.tanh(x * wl_ref[...]) + jnp.tanh(x * wr_ref[...])
    out_ref[0, 0] = jnp.sum(t)


def fused_cat_tanh_sum(x2d: jax.Array, w_left: jax.Array, w_right: jax.Array) -> jax.Array:
    """One gridless Pallas call; all operands whole-array in VMEM."""
    assert w_left.shape == w_right.shape
    assert x2d.shape[1] == w_left.shape[1]
    assert x2d.shape[0] in (1, w_left.shape[0])
    out = pl.pallas_call(
        _fused_cat_tanh_sum_kernel,
        out_shape=jax.ShapeDtypeStruct((1, 1), jnp.float32),
        in_specs=[
            pl.BlockSpec(memory_space=pltpu.MemorySpace.VMEM),
            pl.BlockSpec(memory_space=pltpu.MemorySpace.VMEM),
            pl.BlockSpec(memory_space=pltpu.MemorySpace.VMEM),
        ],
        # Scalar result on the scalar path -> no masked vst into a padded tile.
        out_specs=pl.BlockSpec(memory_space=pltpu.MemorySpace.SMEM),
    )(x2d, w_left, w_right)
    return out[0, 0]


def model_forward(x: jax.Array, w: jax.Array) -> jax.Array:
    """Mirrors Model.forward. x: (B, C, D) input, w: (3, 4) parameter."""
    B = x.shape[0]
    # Contiguous reshape only; the concat is fused into the kernel.
    x2d = x.reshape(B, -1).astype(jnp.float32)          # (B, C*D)
    w = w.astype(jnp.float32)
    cd = x2d.shape[1]
    assert w.shape[-1] == 2 * cd, (
        "elementwise multiply requires 2*C*D == w.shape[-1] "
        f"(got 2*C*D={2 * cd}, w={w.shape})")
    if w.shape[0] != B:
        # PyTorch: w.repeat(B,1,1) -> (B, 3, 4); y (B, 2CD) only broadcasts
        # against it when B == 1. Mirror that validity; the kernel broadcasts
        # the single x row over the weight rows (no HBM duplication).
        assert B == 1, (
            "PyTorch reference rejects this broadcast "
            f"(B={B}, w rows={w.shape[0]})")
    # Split w into lane-0-aligned halves in HBM so the kernel sees aligned
    # VMEM operands (no in-kernel non-128-aligned lane slice / XLU relayout).
    w_left = w[:, :cd]
    w_right = w[:, cd:]
    return fused_cat_tanh_sum(x2d, w_left, w_right)


if __name__ == "__main__":
    key = jax.random.PRNGKey(0)
    kx, kw = jax.random.split(key)

    # Valid forward: B == 3 (matches self.x.shape[0], no repeat) and
    # 2*C*D == 4 so the elementwise multiply is shape-compatible.
    x = jax.random.normal(kx, (3, 1, 2), dtype=jnp.float32)
    # Deterministic stand-in for self.x = torch.randn(3, 4)
    w_param = jax.random.normal(kw, (3, 4), dtype=jnp.float32)

    out = model_forward(x, w_param)
    out = jax.block_until_ready(out)

    # Pure-JAX reference (explicit concat) for sanity.
    y_ref = jnp.concatenate([x, x], axis=1).reshape(x.shape[0], -1)
    ref = jnp.sum(jnp.tanh(y_ref * w_param))
    assert jnp.allclose(out, ref, atol=1e-5, rtol=1e-5), (out, ref)

    # Also exercise the (valid) repeat/broadcast branch: B == 1.
    x1 = jax.random.normal(kx, (1, 1, 2), dtype=jnp.float32)
    out1 = jax.block_until_ready(model_forward(x1, w_param))
    y1 = jnp.concatenate([x1, x1], axis=1).reshape(1, -1)      # (1, 4)
    ref1 = jnp.sum(jnp.tanh(y1[:, None, :] * w_param[None, :, :]))
    assert jnp.allclose(out1, ref1, atol=1e-5, rtol=1e-5), (out1, ref1)

    print("KERNEL_OK")
</pallas_src>

<mosaic_0001>
module attributes {stable_mosaic.version = 11 : i64} {
  func.func @_fused_cat_tanh_sum_kernel(%arg0: memref<3x2xf32, #tpu.memory_space<vmem>>, %arg1: memref<3x2xf32, #tpu.memory_space<vmem>>, %arg2: memref<3x2xf32, #tpu.memory_space<vmem>>, %arg3: memref<1x1xf32, #tpu.memory_space<smem>>) attributes {dimension_semantics = [], scalar_prefetch = 0 : i64, scratch_operands = 0 : i64, tpu.core_type = #tpu.core_type<tc>} {
    %c0 = arith.constant 0 : index
    %c0_0 = arith.constant 0 : index
    %0 = vector.load %arg0[%c0, %c0_0] : memref<3x2xf32, #tpu.memory_space<vmem>>, vector<3x2xf32>
    %c0_1 = arith.constant 0 : index
    %c0_2 = arith.constant 0 : index
    %1 = vector.load %arg1[%c0_1, %c0_2] : memref<3x2xf32, #tpu.memory_space<vmem>>, vector<3x2xf32>
    %2 = arith.mulf %0, %1 : vector<3x2xf32>
    %3 = math.tanh %2 : vector<3x2xf32>
    %c0_3 = arith.constant 0 : index
    %c0_4 = arith.constant 0 : index
    %4 = vector.load %arg2[%c0_3, %c0_4] : memref<3x2xf32, #tpu.memory_space<vmem>>, vector<3x2xf32>
    %5 = arith.mulf %0, %4 : vector<3x2xf32>
    %6 = math.tanh %5 : vector<3x2xf32>
    %7 = arith.addf %3, %6 : vector<3x2xf32>
    %8 = vector.shape_cast %7 : vector<3x2xf32> to vector<1x3x2xf32>
    %cst = arith.constant dense<0.000000e+00> : vector<1xf32>
    %9 = vector.multi_reduction <add>, %8, %cst [1, 2] : vector<1x3x2xf32> to vector<1xf32>
    %10 = vector.shape_cast %9 : vector<1xf32> to vector<1x1x1xf32>
    %11 = vector.extract %10[0, 0, 0] : f32 from vector<1x1x1xf32>
    %c0_5 = arith.constant 0 : index
    %c0_6 = arith.constant 0 : index
    %12 = memref.load %arg3[%c0_5, %c0_6] : memref<1x1xf32, #tpu.memory_space<smem>>
    memref.store %11, %arg3[%c0_5, %c0_6] : memref<1x1xf32, #tpu.memory_space<smem>>
    return
  }
}

</mosaic_0001>

<llo_original>
// kernel: tpu_custom_call.1
$region0: #{tpu_custom_call.1}
  #allocation0 [shape = 'u32[]', space=smem, size = 0x4, offset = 0x4, fixed_abs, tag = 'smem constant byte address 0x4 - core index']
  #allocation1 [shape = 'u32[144,128]{1,0:T(1,128)}', space=vmem, size = 0x12000, scoped, tag = 'internal scratch']
  %s0 = inlined_call_operand.vmem [shape: f32[3,2], index: 0, kind: input, shape index: {}]
  %s1 = inlined_call_operand.vmem [shape: f32[3,2], index: 1, kind: input, shape index: {}]
  %s2 = inlined_call_operand.vmem [shape: f32[3,2], index: 2, kind: input, shape index: {}]
  %s3 = inlined_call_operand.hbm [shape: f32[1,1], index: 3, kind: output, shape index: {}]
  %s4 = sld [smem:[#allocation0]]
  $region22: #{tpu_custom_call.1} parent=0
    _
  %s6 = ssub.s32 1, %s4
  %s7 = scalar_select 0, %s6, %s4
  $region1: #{tpu_custom_call.1} parent=0
    #allocation2 [shape = 'u8[512]{0}', space=smem, size = 0x200, scoped, tag = 'output window, operand 0, single buffered']
    #allocation3 [shape = 's32[1]{0}', space=sflag, size = 0x4, scoped, tag = 'scoped memory for tpu_custom_call.1']
    %8 = vsyncpa [#allocation3], 0
    // Predicated region
    $region2: #{tpu_custom_call.1} parent=1 // pred_check
      _
    $region3: #{tpu_custom_call.1} parent=1 // pred_check_branch
      %10 = sbr.rel (0) target = $region5
    $region4: #{tpu_custom_call.1} parent=1 // pred_region
      _
    $region5: #{tpu_custom_call.1} parent=1 // pred_fallthru
      _
    // Predicated region
    $region6: #{tpu_custom_call.1} parent=1 // pred_check
      _
    $region7: #{tpu_custom_call.1} parent=1 // pred_check_branch
      %12 = sbr.rel (0) target = $region9
    $region8: #{tpu_custom_call.1} parent=1 // pred_region
      _
    $region9: #{tpu_custom_call.1} parent=1 // pred_fallthru
      _
    // Predicated region
    $region10: #{tpu_custom_call.1} parent=1 // pred_check
      _
    $region11: #{tpu_custom_call.1} parent=1 // pred_check_branch
      %14 = sbr.rel (0) target = $region13
    $region12: #{tpu_custom_call.1} parent=1 // pred_region
      _
    $region13: #{tpu_custom_call.1} parent=1 // pred_fallthru
      _
    %v15 = vld [vmem:[%s0] sm:$0x7]
    %v16 = vld [vmem:[%s1] sm:$0x7]
    %v17 = vmul.f32 %v15, %v16
    %v18 = vtanh.pop %v17
    %v19 = vld [vmem:[%s2] sm:$0x7]
    %v20 = vmul.f32 %v15, %v19
    %v21 = vtanh.pop %v20
    %v22 = vadd.f32 %v18, %v21
    %vm23 = vcmask 10240
    %v24 = vsel %vm23, %v22, 0.0
    %25 = vadd.xlane.f32.xlu0 %v24
    %v26 = vpop.xlane.xlu0 %25
    %v27 = vrot.slane %v26, 4
    %v28 = vadd.f32 %v26, %v27
    %v29 = vrot.slane %v28, 2
    %v30 = vadd.f32 %v28, %v29
    %v31 = vrot.slane %v30, 1
    %v32 = vadd.f32 %v30, %v31
    %s33 = vtos %v32
    %s34 = scalar_lea.smem [#allocation2], 0
    %35 = sst [smem:[%s34]] %s33
    // Predicated region
    $region14: #{tpu_custom_call.1} parent=1 // pred_check
      _
    $region15: #{tpu_custom_call.1} parent=1 // pred_check_branch
      %37 = sbr.rel (0) target = $region17
    $region16: #{tpu_custom_call.1} parent=1 // pred_region
      %s39 = ssub.s32 16, 16
      %40 = vsyncadd [#allocation3], %s39
      %43 = dma.smem_to_hbm [#allocation2], 16, %s3, [#allocation3]
    $region17: #{tpu_custom_call.1} parent=1 // pred_fallthru
      _
    // Predicated region
    $region18: #{tpu_custom_call.1} parent=1 // pred_check
      _
    $region19: #{tpu_custom_call.1} parent=1 // pred_check_branch
      %45 = sbr.rel (0) target = $region21
    $region20: #{tpu_custom_call.1} parent=1 // pred_region
      %46 = dma.done [#allocation3], 16
    $region21: #{tpu_custom_call.1} parent=1 // pred_fallthru
      _
    %47 = sfence
    %48 = vsyncpa [#allocation3], 1

</llo_original>
